<compile_context>
chip_gen: v6e
topology: v6e:2x2x1
jax: 0.10.0
libtpu: 0.0.40
codegen_flags: <defaults>
</compile_context>

<pallas_src>
import functools

import jax
import jax.numpy as jnp
from jax import lax
from jax.experimental import pallas as pl
from jax.experimental.pallas import tpu as pltpu


def _kmeanspp_kernel(first_ref, x_ref, e_ref, out_ref, gram_ref):
    """k-means++ selection for one batch element.

    first_ref : SMEM (B,) int32        -- uniform first index per batch (prefetch)
    x_ref     : VMEM (T, D)            -- tokens of this batch element (native dtype)
    e_ref     : VMEM (max(K-1,1), T)   -- host-generated Exp(1) noise per step
    out_ref   : VMEM (K, D)            -- selected tokens
    gram_ref  : VMEM (T, T) f32        -- scratch: Gram matrix X.X^T
    """
    b = pl.program_id(0)
    T, D = x_ref.shape
    K = out_ref.shape[0]

    # --- one-time per-batch-element precompute (single slab pass) ---
    x_nat = x_ref[...]                                    # the only full-slab read
    xf = x_nat.astype(jnp.float32)

    # Gram matrix G[s, t] = <x_s, x_t>, f32 accumulate on the MXU.  Every
    # sampling step afterwards only needs one (1, T) row of it.
    gram_ref[...] = jnp.einsum("sd,td->st", x_nat, x_nat,
                               preferred_element_type=jnp.float32)

    # Lane-dense per-token squared norms, shape (1, T), f32 (bf16-safe):
    # xsq[t] = sum_d x[t, d]^2 == ones(1, D) @ (x*x)^T.
    ones = jnp.ones((1, D), jnp.float32)
    xsq = jnp.einsum("cd,td->ct", ones, xf * xf,
                     preferred_element_type=jnp.float32)   # (1, T)

    ids = lax.broadcasted_iota(jnp.int32, (1, T), 1)       # (1, T) lane-dense

    def dist_to(idx):
        """(row of x at idx, lane-dense squared distances of all tokens to it)."""
        c = x_ref[pl.ds(idx, 1), :]                        # (1, D) native dtype
        cf = c.astype(jnp.float32)
        csq = jnp.sum(cf * cf)                             # scalar, f32
        cross = gram_ref[pl.ds(idx, 1), :]                 # (1, T) f32 Gram row
        d2 = jnp.maximum(xsq + csq - 2.0 * cross, 0.0)
        # Exactly zero at the selected token (kills fp rounding from the
        # quadratic identity -> +inf race key, never re-selected).
        d2 = jnp.where(ids == idx, 0.0, d2)
        return c, d2

    # --- first centroid: uniformly random index (drawn on host) ---
    first = first_ref[b]
    c0, d2 = dist_to(first)
    out_ref[pl.ds(0, 1), :] = c0

    # --- remaining k-1 centroids: multinomial(distances) via exponential race
    #     argmin_t E_t / w_t  with  w_t = sqrt(d2_t)  ~  Categorical(w / sum w).
    def step_body(step, d2):
        e = e_ref[pl.ds(step, 1), :]                       # (1, T) Exp(1) noise
        key = jnp.where(d2 > 0.0, e * lax.rsqrt(d2), jnp.inf)
        m = jnp.min(key)
        idx = jnp.min(jnp.where(key == m, ids, T))         # argmin, first tie
        c, d2_new = dist_to(idx)
        out_ref[pl.ds(step + 1, 1), :] = c
        return jnp.minimum(d2, d2_new)

    if K - 1 <= 8:
        # Small K: fully unrolled for LLO scheduler visibility.
        for s in range(K - 1):
            d2 = step_body(s, d2)
    else:
        # Larger K: bound live ranges (vreg pressure / compile time).
        d2 = lax.fori_loop(0, K - 1, step_body, d2)


def _ceil_to(v, m):
    return -(-v // m) * m


@functools.partial(jax.jit, static_argnames=("k",))
def diverse_sampler(x, key, *, k):
    """JAX/Pallas equivalent of DiverseSampler(k).forward(x).

    Returns (tokens, 0.0) with tokens of shape (B, k, D).
    """
    B, T, D = x.shape
    k_first, k_noise = jax.random.split(key)
    first_idx = jax.random.randint(k_first, (B,), 0, T, dtype=jnp.int32)

    # Exp(1) noise for the (k-1) race draws, pre-generated so the serial
    # in-kernel loop carries no log on its critical path (and the kernel needs
    # no TPU-only stateful PRNG primitive).  u strictly in (0, 1) => E finite>0.
    u = jax.random.uniform(k_noise, (B, max(k - 1, 1), T), dtype=jnp.float32,
                           minval=jnp.finfo(jnp.float32).tiny, maxval=1.0)
    exp_noise = -jnp.log(u)

    # Explicit VMEM budget: double-buffered blocks + Gram scratch + headroom.
    itemsize = jnp.dtype(x.dtype).itemsize
    gram_bytes = _ceil_to(T, 8) * _ceil_to(T, 128) * 4
    budget = (2 * T * _ceil_to(D, 128) * itemsize                 # x block
              + 2 * max(k - 1, 1) * _ceil_to(T, 128) * 4          # noise block
              + 2 * _ceil_to(k, 8) * _ceil_to(D, 128) * itemsize  # out block
              + gram_bytes
              + (4 << 20))                                        # headroom
    vmem_limit = int(min(max(budget, 32 << 20), 100 << 20))
    # TODO(synk): for T >~ 2048 on v7x (64 MiB physical VMEM) the full (T, T)
    # Gram scratch no longer fits; tile the Gram into column panels or fall
    # back to the per-step GEMV path there.

    out = pl.pallas_call(
        _kmeanspp_kernel,
        out_shape=jax.ShapeDtypeStruct((B, k, D), x.dtype),
        grid_spec=pltpu.PrefetchScalarGridSpec(
            num_scalar_prefetch=1,
            grid=(B,),
            in_specs=[
                pl.BlockSpec((None, T, D), lambda b, fi: (b, 0, 0)),
                pl.BlockSpec((None, max(k - 1, 1), T), lambda b, fi: (b, 0, 0)),
            ],
            out_specs=pl.BlockSpec((None, k, D), lambda b, fi: (b, 0, 0)),
            scratch_shapes=[pltpu.VMEM((T, T), jnp.float32)],
        ),
        compiler_params=pltpu.CompilerParams(
            # Batch elements are fully independent -> shard across TCs (v7x).
            dimension_semantics=("parallel",),
            vmem_limit_bytes=vmem_limit,
        ),
    )(first_idx, x, exp_noise)
    return out, 0.0


if __name__ == "__main__":
    key = jax.random.PRNGKey(0)
    k_data, k_sample = jax.random.split(key)

    B, T, D = 2, 16, 32
    k = 4
    x = jax.random.normal(k_data, (B, T, D), dtype=jnp.float32)

    tokens, aux = diverse_sampler(x, k_sample, k=k)
    tokens = jax.block_until_ready(tokens)

    assert tokens.shape == (B, k, D), tokens.shape
    assert tokens.dtype == x.dtype

    # sanity: every selected token must be an actual row of x for that batch
    import numpy as np
    xn = np.asarray(x)
    tn = np.asarray(tokens)
    for b in range(B):
        for j in range(k):
            dists = np.linalg.norm(xn[b] - tn[b, j][None, :], axis=-1)
            assert np.min(dists) < 1e-5, (b, j, np.min(dists))

    print("KERNEL_OK")
</pallas_src>

<mosaic_0001>
module attributes {stable_mosaic.version = 11 : i64} {
  func.func @_kmeanspp_kernel(%arg0: i32, %arg1: memref<2xi32, #tpu.memory_space<smem>>, %arg2: memref<1x16x32xf32, #tpu.memory_space<vmem>>, %arg3: memref<1x3x16xf32, #tpu.memory_space<vmem>>, %arg4: memref<1x4x32xf32, #tpu.memory_space<vmem>>, %arg5: memref<16x16xf32, #tpu.memory_space<vmem>>) attributes {dimension_semantics = [#tpu.dimension_semantics<parallel>], iteration_bounds = array<i64: 2>, scalar_prefetch = 1 : i64, scratch_operands = 1 : i64, tpu.core_type = #tpu.core_type<tc>, window_params = [{transform_indices = @transform_0, window_bounds = array<i64: 1, 16, 32>}, {transform_indices = @transform_1, window_bounds = array<i64: 1, 3, 16>}, {transform_indices = @transform_2, window_bounds = array<i64: 1, 4, 32>}]} {
    %c0 = arith.constant 0 : index
    %c0_0 = arith.constant 0 : index
    %c0_1 = arith.constant 0 : index
    %0 = vector.load %arg2[%c0, %c0_0, %c0_1] : memref<1x16x32xf32, #tpu.memory_space<vmem>>, vector<1x16x32xf32>
    %1 = vector.shape_cast %0 : vector<1x16x32xf32> to vector<16x32xf32>
    "tpu.trace_start"() <{level = 10 : i32, message = "sd,td->st"}> : () -> ()
    %cst = arith.constant dense<0.000000e+00> : vector<16x16xf32>
    %2 = tpu.matmul %1, %1, %cst {dimension_numbers = #tpu.dot_dimension_numbers<[1], [1], [0], [0], [0, 0, 1, 0], [], []>} : vector<16x32xf32>, vector<16x32xf32>, vector<16x16xf32> -> vector<16x16xf32>
    "tpu.trace_stop"() : () -> ()
    %c0_2 = arith.constant 0 : index
    %c0_3 = arith.constant 0 : index
    %3 = vector.load %arg5[%c0_2, %c0_3] : memref<16x16xf32, #tpu.memory_space<vmem>>, vector<16x16xf32>
    tpu.vector_store %arg5[%c0_2, %c0_3], %2 {strides = array<i32>} : memref<16x16xf32, #tpu.memory_space<vmem>>, vector<16x16xf32>,
    %cst_4 = arith.constant 1.000000e+00 : f32
    %4 = vector.broadcast %cst_4 : f32 to vector<1x32xf32>
    %5 = arith.mulf %1, %1 : vector<16x32xf32>
    "tpu.trace_start"() <{level = 10 : i32, message = "cd,td->ct"}> : () -> ()
    %cst_5 = arith.constant dense<0.000000e+00> : vector<1x16xf32>
    %6 = tpu.matmul %4, %5, %cst_5 {dimension_numbers = #tpu.dot_dimension_numbers<[1], [1], [0], [0], [0, 0, 1, 0], [], []>} : vector<1x32xf32>, vector<16x32xf32>, vector<1x16xf32> -> vector<1x16xf32>
    "tpu.trace_stop"() : () -> ()
    %7 = tpu.iota {dimensions = array<i32: 1>} : vector<1x16xi32>
    %8 = arith.index_cast %arg0 : i32 to index
    %9 = memref.load %arg1[%8] : memref<2xi32, #tpu.memory_space<smem>>
    %c0_6 = arith.constant 0 : index
    %10 = arith.index_cast %9 : i32 to index
    %c0_7 = arith.constant 0 : index
    %11 = vector.load %arg2[%c0_6, %10, %c0_7] : memref<1x16x32xf32, #tpu.memory_space<vmem>>, vector<1x1x32xf32>
    %12 = vector.shape_cast %11 : vector<1x1x32xf32> to vector<1x32xf32>
    %13 = arith.mulf %12, %12 : vector<1x32xf32>
    %14 = vector.shape_cast %13 : vector<1x32xf32> to vector<1x1x32xf32>
    %cst_8 = arith.constant dense<0.000000e+00> : vector<1xf32>
    %15 = vector.multi_reduction <add>, %14, %cst_8 [1, 2] : vector<1x1x32xf32> to vector<1xf32>
    %16 = vector.shape_cast %15 : vector<1xf32> to vector<1x1x1xf32>
    %17 = vector.extract %16[0, 0, 0] : f32 from vector<1x1x1xf32>
    %18 = arith.index_cast %9 : i32 to index
    %c0_9 = arith.constant 0 : index
    %19 = vector.load %arg5[%18, %c0_9] : memref<16x16xf32, #tpu.memory_space<vmem>>, vector<1x16xf32>
    %20 = vector.broadcast %17 : f32 to vector<1x16xf32>
    %21 = arith.addf %6, %20 : vector<1x16xf32>
    %cst_10 = arith.constant 2.000000e+00 : f32
    %22 = vector.broadcast %cst_10 : f32 to vector<1x16xf32>
    %23 = arith.mulf %22, %19 : vector<1x16xf32>
    %24 = arith.subf %21, %23 : vector<1x16xf32>
    %cst_11 = arith.constant 0.000000e+00 : f32
    %25 = vector.broadcast %cst_11 : f32 to vector<1x16xf32>
    %26 = arith.maximumf %24, %25 : vector<1x16xf32>
    %27 = vector.broadcast %9 : i32 to vector<1x16xi32>
    %28 = arith.cmpi eq, %7, %27 : vector<1x16xi32>
    %cst_12 = arith.constant 0.000000e+00 : f32
    %29 = vector.broadcast %cst_12 : f32 to vector<1x16xf32>
    %30 = arith.select %28, %29, %26 : vector<1x16xi1>, vector<1x16xf32>
    %c0_13 = arith.constant 0 : index
    %c0_14 = arith.constant 0 : index
    %c0_15 = arith.constant 0 : index
    %31 = vector.load %arg4[%c0_13, %c0_14, %c0_15] : memref<1x4x32xf32, #tpu.memory_space<vmem>>, vector<1x1x32xf32>
    %32 = vector.shape_cast %31 : vector<1x1x32xf32> to vector<1x32xf32>
    %33 = vector.shape_cast %12 : vector<1x32xf32> to vector<1x1x32xf32>
    tpu.vector_store %arg4[%c0_13, %c0_14, %c0_15], %33 {strides = array<i32>} : memref<1x4x32xf32, #tpu.memory_space<vmem>>, vector<1x1x32xf32>,
    %c0_16 = arith.constant 0 : index
    %c0_17 = arith.constant 0 : index
    %c0_18 = arith.constant 0 : index
    %34 = vector.load %arg3[%c0_16, %c0_17, %c0_18] : memref<1x3x16xf32, #tpu.memory_space<vmem>>, vector<1x1x16xf32>
    %35 = vector.shape_cast %34 : vector<1x1x16xf32> to vector<1x16xf32>
    %cst_19 = arith.constant 0.000000e+00 : f32
    %36 = vector.broadcast %cst_19 : f32 to vector<1x16xf32>
    %37 = arith.cmpf ogt, %30, %36 : vector<1x16xf32>
    %38 = math.rsqrt %30 : vector<1x16xf32>
    %39 = arith.mulf %35, %38 : vector<1x16xf32>
    %cst_20 = arith.constant 0x7F800000 : f32
    %40 = vector.broadcast %cst_20 : f32 to vector<1x16xf32>
    %41 = arith.select %37, %39, %40 : vector<1x16xi1>, vector<1x16xf32>
    %42 = vector.shape_cast %41 : vector<1x16xf32> to vector<1x1x16xf32>
    %cst_21 = arith.constant dense<0x7F800000> : vector<1xf32>
    %43 = vector.multi_reduction <minimumf>, %42, %cst_21 [1, 2] : vector<1x1x16xf32> to vector<1xf32>
    %44 = vector.shape_cast %43 : vector<1xf32> to vector<1x1x1xf32>
    %45 = vector.extract %44[0, 0, 0] : f32 from vector<1x1x1xf32>
    %46 = vector.broadcast %45 : f32 to vector<1x16xf32>
    %47 = arith.cmpf oeq, %41, %46 : vector<1x16xf32>
    %c16_i32 = arith.constant 16 : i32
    %48 = vector.broadcast %c16_i32 : i32 to vector<1x16xi32>
    %49 = arith.select %47, %7, %48 : vector<1x16xi1>, vector<1x16xi32>
    %50 = vector.shape_cast %49 : vector<1x16xi32> to vector<1x1x16xi32>
    %cst_22 = arith.constant dense<2147483647> : vector<1xi32>
    %51 = vector.multi_reduction <minsi>, %50, %cst_22 [1, 2] : vector<1x1x16xi32> to vector<1xi32>
    %52 = vector.shape_cast %51 : vector<1xi32> to vector<1x1x1xi32>
    %53 = vector.extract %52[0, 0, 0] : i32 from vector<1x1x1xi32>
    %c0_23 = arith.constant 0 : index
    %54 = arith.index_cast %53 : i32 to index
    %c0_24 = arith.constant 0 : index
    %55 = vector.load %arg2[%c0_23, %54, %c0_24] : memref<1x16x32xf32, #tpu.memory_space<vmem>>, vector<1x1x32xf32>
    %56 = vector.shape_cast %55 : vector<1x1x32xf32> to vector<1x32xf32>
    %57 = arith.mulf %56, %56 : vector<1x32xf32>
    %58 = vector.shape_cast %57 : vector<1x32xf32> to vector<1x1x32xf32>
    %cst_25 = arith.constant dense<0.000000e+00> : vector<1xf32>
    %59 = vector.multi_reduction <add>, %58, %cst_25 [1, 2] : vector<1x1x32xf32> to vector<1xf32>
    %60 = vector.shape_cast %59 : vector<1xf32> to vector<1x1x1xf32>
    %61 = vector.extract %60[0, 0, 0] : f32 from vector<1x1x1xf32>
    %62 = arith.index_cast %53 : i32 to index
    %c0_26 = arith.constant 0 : index
    %63 = vector.load %arg5[%62, %c0_26] : memref<16x16xf32, #tpu.memory_space<vmem>>, vector<1x16xf32>
    %64 = vector.broadcast %61 : f32 to vector<1x16xf32>
    %65 = arith.addf %6, %64 : vector<1x16xf32>
    %cst_27 = arith.constant 2.000000e+00 : f32
    %66 = vector.broadcast %cst_27 : f32 to vector<1x16xf32>
    %67 = arith.mulf %66, %63 : vector<1x16xf32>
    %68 = arith.subf %65, %67 : vector<1x16xf32>
    %cst_28 = arith.constant 0.000000e+00 : f32
    %69 = vector.broadcast %cst_28 : f32 to vector<1x16xf32>
    %70 = arith.maximumf %68, %69 : vector<1x16xf32>
    %71 = vector.broadcast %53 : i32 to vector<1x16xi32>
    %72 = arith.cmpi eq, %7, %71 : vector<1x16xi32>
    %cst_29 = arith.constant 0.000000e+00 : f32
    %73 = vector.broadcast %cst_29 : f32 to vector<1x16xf32>
    %74 = arith.select %72, %73, %70 : vector<1x16xi1>, vector<1x16xf32>
    %c0_30 = arith.constant 0 : index
    %c1 = arith.constant 1 : index
    %c0_31 = arith.constant 0 : index
    %75 = vector.load %arg4[%c0_30, %c1, %c0_31] : memref<1x4x32xf32, #tpu.memory_space<vmem>>, vector<1x1x32xf32>
    %76 = vector.shape_cast %75 : vector<1x1x32xf32> to vector<1x32xf32>
    %77 = vector.shape_cast %56 : vector<1x32xf32> to vector<1x1x32xf32>
    tpu.vector_store %arg4[%c0_30, %c1, %c0_31], %77 {strides = array<i32>} : memref<1x4x32xf32, #tpu.memory_space<vmem>>, vector<1x1x32xf32>,
    %78 = arith.minimumf %30, %74 : vector<1x16xf32>
    %c0_32 = arith.constant 0 : index
    %c1_33 = arith.constant 1 : index
    %c0_34 = arith.constant 0 : index
    %79 = vector.load %arg3[%c0_32, %c1_33, %c0_34] : memref<1x3x16xf32, #tpu.memory_space<vmem>>, vector<1x1x16xf32>
    %80 = vector.shape_cast %79 : vector<1x1x16xf32> to vector<1x16xf32>
    %cst_35 = arith.constant 0.000000e+00 : f32
    %81 = vector.broadcast %cst_35 : f32 to vector<1x16xf32>
    %82 = arith.cmpf ogt, %78, %81 : vector<1x16xf32>
    %83 = math.rsqrt %78 : vector<1x16xf32>
    %84 = arith.mulf %80, %83 : vector<1x16xf32>
    %cst_36 = arith.constant 0x7F800000 : f32
    %85 = vector.broadcast %cst_36 : f32 to vector<1x16xf32>
    %86 = arith.select %82, %84, %85 : vector<1x16xi1>, vector<1x16xf32>
    %87 = vector.shape_cast %86 : vector<1x16xf32> to vector<1x1x16xf32>
    %cst_37 = arith.constant dense<0x7F800000> : vector<1xf32>
    %88 = vector.multi_reduction <minimumf>, %87, %cst_37 [1, 2] : vector<1x1x16xf32> to vector<1xf32>
    %89 = vector.shape_cast %88 : vector<1xf32> to vector<1x1x1xf32>
    %90 = vector.extract %89[0, 0, 0] : f32 from vector<1x1x1xf32>
    %91 = vector.broadcast %90 : f32 to vector<1x16xf32>
    %92 = arith.cmpf oeq, %86, %91 : vector<1x16xf32>
    %c16_i32_38 = arith.constant 16 : i32
    %93 = vector.broadcast %c16_i32_38 : i32 to vector<1x16xi32>
    %94 = arith.select %92, %7, %93 : vector<1x16xi1>, vector<1x16xi32>
    %95 = vector.shape_cast %94 : vector<1x16xi32> to vector<1x1x16xi32>
    %cst_39 = arith.constant dense<2147483647> : vector<1xi32>
    %96 = vector.multi_reduction <minsi>, %95, %cst_39 [1, 2] : vector<1x1x16xi32> to vector<1xi32>
    %97 = vector.shape_cast %96 : vector<1xi32> to vector<1x1x1xi32>
    %98 = vector.extract %97[0, 0, 0] : i32 from vector<1x1x1xi32>
    %c0_40 = arith.constant 0 : index
    %99 = arith.index_cast %98 : i32 to index
    %c0_41 = arith.constant 0 : index
    %100 = vector.load %arg2[%c0_40, %99, %c0_41] : memref<1x16x32xf32, #tpu.memory_space<vmem>>, vector<1x1x32xf32>
    %101 = vector.shape_cast %100 : vector<1x1x32xf32> to vector<1x32xf32>
    %102 = arith.mulf %101, %101 : vector<1x32xf32>
    %103 = vector.shape_cast %102 : vector<1x32xf32> to vector<1x1x32xf32>
    %cst_42 = arith.constant dense<0.000000e+00> : vector<1xf32>
    %104 = vector.multi_reduction <add>, %103, %cst_42 [1, 2] : vector<1x1x32xf32> to vector<1xf32>
    %105 = vector.shape_cast %104 : vector<1xf32> to vector<1x1x1xf32>
    %106 = vector.extract %105[0, 0, 0] : f32 from vector<1x1x1xf32>
    %107 = arith.index_cast %98 : i32 to index
    %c0_43 = arith.constant 0 : index
    %108 = vector.load %arg5[%107, %c0_43] : memref<16x16xf32, #tpu.memory_space<vmem>>, vector<1x16xf32>
    %109 = vector.broadcast %106 : f32 to vector<1x16xf32>
    %110 = arith.addf %6, %109 : vector<1x16xf32>
    %cst_44 = arith.constant 2.000000e+00 : f32
    %111 = vector.broadcast %cst_44 : f32 to vector<1x16xf32>
    %112 = arith.mulf %111, %108 : vector<1x16xf32>
    %113 = arith.subf %110, %112 : vector<1x16xf32>
    %cst_45 = arith.constant 0.000000e+00 : f32
    %114 = vector.broadcast %cst_45 : f32 to vector<1x16xf32>
    %115 = arith.maximumf %113, %114 : vector<1x16xf32>
    %116 = vector.broadcast %98 : i32 to vector<1x16xi32>
    %117 = arith.cmpi eq, %7, %116 : vector<1x16xi32>
    %cst_46 = arith.constant 0.000000e+00 : f32
    %118 = vector.broadcast %cst_46 : f32 to vector<1x16xf32>
    %119 = arith.select %117, %118, %115 : vector<1x16xi1>, vector<1x16xf32>
    %c0_47 = arith.constant 0 : index
    %c2 = arith.constant 2 : index
    %c0_48 = arith.constant 0 : index
    %120 = vector.load %arg4[%c0_47, %c2, %c0_48] : memref<1x4x32xf32, #tpu.memory_space<vmem>>, vector<1x1x32xf32>
    %121 = vector.shape_cast %120 : vector<1x1x32xf32> to vector<1x32xf32>
    %122 = vector.shape_cast %101 : vector<1x32xf32> to vector<1x1x32xf32>
    tpu.vector_store %arg4[%c0_47, %c2, %c0_48], %122 {strides = array<i32>} : memref<1x4x32xf32, #tpu.memory_space<vmem>>, vector<1x1x32xf32>,
    %123 = arith.minimumf %78, %119 : vector<1x16xf32>
    %c0_49 = arith.constant 0 : index
    %c2_50 = arith.constant 2 : index
    %c0_51 = arith.constant 0 : index
    %124 = vector.load %arg3[%c0_49, %c2_50, %c0_51] : memref<1x3x16xf32, #tpu.memory_space<vmem>>, vector<1x1x16xf32>
    %125 = vector.shape_cast %124 : vector<1x1x16xf32> to vector<1x16xf32>
    %cst_52 = arith.constant 0.000000e+00 : f32
    %126 = vector.broadcast %cst_52 : f32 to vector<1x16xf32>
    %127 = arith.cmpf ogt, %123, %126 : vector<1x16xf32>
    %128 = math.rsqrt %123 : vector<1x16xf32>
    %129 = arith.mulf %125, %128 : vector<1x16xf32>
    %cst_53 = arith.constant 0x7F800000 : f32
    %130 = vector.broadcast %cst_53 : f32 to vector<1x16xf32>
    %131 = arith.select %127, %129, %130 : vector<1x16xi1>, vector<1x16xf32>
    %132 = vector.shape_cast %131 : vector<1x16xf32> to vector<1x1x16xf32>
    %cst_54 = arith.constant dense<0x7F800000> : vector<1xf32>
    %133 = vector.multi_reduction <minimumf>, %132, %cst_54 [1, 2] : vector<1x1x16xf32> to vector<1xf32>
    %134 = vector.shape_cast %133 : vector<1xf32> to vector<1x1x1xf32>
    %135 = vector.extract %134[0, 0, 0] : f32 from vector<1x1x1xf32>
    %136 = vector.broadcast %135 : f32 to vector<1x16xf32>
    %137 = arith.cmpf oeq, %131, %136 : vector<1x16xf32>
    %c16_i32_55 = arith.constant 16 : i32
    %138 = vector.broadcast %c16_i32_55 : i32 to vector<1x16xi32>
    %139 = arith.select %137, %7, %138 : vector<1x16xi1>, vector<1x16xi32>
    %140 = vector.shape_cast %139 : vector<1x16xi32> to vector<1x1x16xi32>
    %cst_56 = arith.constant dense<2147483647> : vector<1xi32>
    %141 = vector.multi_reduction <minsi>, %140, %cst_56 [1, 2] : vector<1x1x16xi32> to vector<1xi32>
    %142 = vector.shape_cast %141 : vector<1xi32> to vector<1x1x1xi32>
    %143 = vector.extract %142[0, 0, 0] : i32 from vector<1x1x1xi32>
    %c0_57 = arith.constant 0 : index
    %144 = arith.index_cast %143 : i32 to index
    %c0_58 = arith.constant 0 : index
    %145 = vector.load %arg2[%c0_57, %144, %c0_58] : memref<1x16x32xf32, #tpu.memory_space<vmem>>, vector<1x1x32xf32>
    %146 = vector.shape_cast %145 : vector<1x1x32xf32> to vector<1x32xf32>
    %c0_59 = arith.constant 0 : index
    %c3 = arith.constant 3 : index
    %c0_60 = arith.constant 0 : index
    %147 = vector.load %arg4[%c0_59, %c3, %c0_60] : memref<1x4x32xf32, #tpu.memory_space<vmem>>, vector<1x1x32xf32>
    %148 = vector.shape_cast %147 : vector<1x1x32xf32> to vector<1x32xf32>
    %149 = vector.shape_cast %146 : vector<1x32xf32> to vector<1x1x32xf32>
    tpu.vector_store %arg4[%c0_59, %c3, %c0_60], %149 {strides = array<i32>} : memref<1x4x32xf32, #tpu.memory_space<vmem>>, vector<1x1x32xf32>,
    return
  }
  func.func @transform_0(%arg0: i32, %arg1: memref<2xi32, #tpu.memory_space<smem>>) -> (i32, i32, i32) {
    %c0_i32 = arith.constant 0 : i32
    %c0_i32_0 = arith.constant 0 : i32
    %c0_i32_1 = arith.constant 0 : i32
    return %arg0, %c0_i32, %c0_i32_0 : i32, i32, i32
  }
  func.func @transform_1(%arg0: i32, %arg1: memref<2xi32, #tpu.memory_space<smem>>) -> (i32, i32, i32) {
    %c0_i32 = arith.constant 0 : i32
    %c0_i32_0 = arith.constant 0 : i32
    %c0_i32_1 = arith.constant 0 : i32
    return %arg0, %c0_i32, %c0_i32_0 : i32, i32, i32
  }
  func.func @transform_2(%arg0: i32, %arg1: memref<2xi32, #tpu.memory_space<smem>>) -> (i32, i32, i32) {
    %c0_i32 = arith.constant 0 : i32
    %c0_i32_0 = arith.constant 0 : i32
    %c0_i32_1 = arith.constant 0 : i32
    return %arg0, %c0_i32, %c0_i32_0 : i32, i32, i32
  }
}

</mosaic_0001>

<llo_original>
// kernel: diverse_sampler.17
$region0: #{diverse_sampler.17}
  #allocation0 [shape = 'u32[]', space=smem, size = 0x4, offset = 0x4, fixed_abs, tag = 'smem constant byte address 0x4 - core index']
  #allocation1 [shape = 'u32[144,128]{1,0:T(1,128)}', space=vmem, size = 0x12000, scoped, tag = 'internal scratch']
  #allocation2 [shape = 'f32[16,16]{1,0:T(8,128)}', space=vmem, size = 0x2000, scoped, tag = 'scratch operand']
  #allocation3 [shape = 's32[1]{0}', space=sflag, size = 0x4, scoped, tag = 'scoped memory for diverse_sampler.17']
  #allocation4 [shape = 'u8[512]{0}', space=smem, size = 0x200, scoped, tag = 'prefetched SMEM operand 0']
  %s0 = inlined_call_operand.vmem [shape: s32[2], index: 0, kind: input, shape index: {}]
  %s1 = inlined_call_operand.vmem [shape: f32[2,16,32], index: 1, kind: input, shape index: {}]
  %s2 = inlined_call_operand.vmem [shape: f32[2,3,16], index: 2, kind: input, shape index: {}]
  %s3 = inlined_call_operand.hbm [shape: f32[2,4,32], index: 3, kind: output, shape index: {}]
  %s4 = sld [smem:[#allocation0]]
  $region41: #{diverse_sampler.17} parent=0
    _
  %s6 = ssub.s32 1, %s4
  %s7 = scalar_select 0, %s6, %s4
  %s8 = sshll.u32 %s0, 4
  %s9 = int_to_ptr.vmem [resolvable:$true] %s8
  %11 = dma.vmem_to_smem %s9, 16, [#allocation4], [#allocation3]
  %12 = dma.done [#allocation3], 16
  %13 = sfence
  $region1: #{diverse_sampler.17} parent=0
    #allocation5 [shape = 'u8[4096]{0}', space=vmem, size = 0x1000, scoped, tag = 'output window, operand 0']
    #allocation6 [shape = 's32[2]{0}', space=sflag, size = 0x8, scoped, tag = 'scoped memory for diverse_sampler.17']
    %14 = vsyncpa [#allocation6], 0
    %s15 = scalar_lea.sflag [#allocation6], 1
    %16 = vsyncpa %s15, 0
    loop: start=0, step=1, limit=4
    $region2: #{diverse_sampler.17} parent=1 // loop_pre_header
      _
    $region3: #{diverse_sampler.17} parent=1 // loop_header
      %s18 = sphi 0, %s22
      %p19 = scmp.ge.s32.totalorder %s18, 4
      %s28 = sphi 0, %s30
      %s31 = sphi 0, %s28
      %s32 = sphi 0, %s31
      %s48 = sphi 0, %s32
      %s54 = sphi 0, %s56
      %s57 = sphi 0, %s54
      %s58 = sphi 0, %s57
      %s74 = sphi 0, %s58
      %s80 = sphi 0, %s82
      %s83 = sphi 0, %s80
      %s84 = sphi 0, %s83
      %s100 = sphi 0, %s84
    $region4: #{diverse_sampler.17} parent=1 // loop_header_branch
      %21 = sbr.rel (%p19) target = $region8
    $region5: #{diverse_sampler.17} parent=1 // loop_body
      %s23 = ssub.s32 %s18, 1
      %s24 = ssub.s32 %s18, 2
      %s25 = sadd.s32 %s18, 1
      %s26 = ssub.s32 %s18, %s25
      %p27 = scmp.eq.s32.totalorder %s26, 0
      %s29 = sadd.s32 %s28, 1
      %s30 = scalar_select %p27, %s28, %s29
      %p33 = pneg %p27
      %p34 = scmp.eq.s32.totalorder %s18, 1
      %p35 = por %p33, %p34
      %p36 = scmp.ne.s32.totalorder %s28, %s31
      %p37 = scmp.eq.s32.totalorder %s18, 0
      %p38 = por %p36, %p37
      %p39 = scmp.ne.s32.totalorder %s28, %s31
      %p40 = scmp.eq.s32.totalorder %s23, 1
      %p41 = por %p39, %p40
      %p42 = scmp.ne.s32.totalorder %s31, %s32
      %p43 = scmp.eq.s32.totalorder %s23, 0
      %p44 = por %p42, %p43
      %p45 = scmp.ne.s32.totalorder %s31, %s32
      %p46 = scmp.eq.s32.totalorder %s24, 1
      %p47 = por %p45, %p46
      %p49 = scmp.ne.s32.totalorder %s32, %s48
      %p50 = scmp.eq.s32.totalorder %s24, 0
      %p51 = por %p49, %p50
      %s52 = ssub.s32 %s18, %s25
      %p53 = scmp.eq.s32.totalorder %s52, 0
      %s55 = sadd.s32 %s54, 1
      %s56 = scalar_select %p53, %s54, %s55
      %p59 = pneg %p53
      %p60 = scmp.eq.s32.totalorder %s18, 1
      %p61 = por %p59, %p60
      %p62 = scmp.ne.s32.totalorder %s54, %s57
      %p63 = scmp.eq.s32.totalorder %s18, 0
      %p64 = por %p62, %p63
      %p65 = scmp.ne.s32.totalorder %s54, %s57
      %p66 = scmp.eq.s32.totalorder %s23, 1
      %p67 = por %p65, %p66
      %p68 = scmp.ne.s32.totalorder %s57, %s58
      %p69 = scmp.eq.s32.totalorder %s23, 0
      %p70 = por %p68, %p69
      %p71 = scmp.ne.s32.totalorder %s57, %s58
      %p72 = scmp.eq.s32.totalorder %s24, 1
      %p73 = por %p71, %p72
      %p75 = scmp.ne.s32.totalorder %s58, %s74
      %p76 = scmp.eq.s32.totalorder %s24, 0
      %p77 = por %p75, %p76
      %s78 = ssub.s32 %s18, %s25
      %p79 = scmp.eq.s32.totalorder %s78, 0
      %s81 = sadd.s32 %s80, 1
      %s82 = scalar_select %p79, %s80, %s81
      %p85 = pneg %p79
      %p86 = scmp.eq.s32.totalorder %s18, 1
      %p87 = por %p85, %p86
      %p88 = scmp.ne.s32.totalorder %s80, %s83
      %p89 = scmp.eq.s32.totalorder %s18, 0
      %p90 = por %p88, %p89
      %p91 = scmp.ne.s32.totalorder %s80, %s83
      %p92 = scmp.eq.s32.totalorder %s23, 1
      %p93 = por %p91, %p92
      %p94 = scmp.ne.s32.totalorder %s83, %s84
      %p95 = scmp.eq.s32.totalorder %s23, 0
      %p96 = por %p94, %p95
      %p97 = scmp.ne.s32.totalorder %s83, %s84
      %p98 = scmp.eq.s32.totalorder %s24, 1
      %p99 = por %p97, %p98
      %p101 = scmp.ne.s32.totalorder %s84, %s100
      %p102 = scmp.eq.s32.totalorder %s24, 0
      %p103 = por %p101, %p102
      %p104 = scmp.le.s32.totalorder 1, %s18
      %p105 = scmp.lt.s32.totalorder %s18, 3
      %p106 = pnand %p104, %p105
      %p107 = pneg %p106
      // Predicated region
      $region9: #{diverse_sampler.17} parent=5 // pred_check
        _
      $region10: #{diverse_sampler.17} parent=5 // pred_check_branch
        %109 = sbr.rel (%p106) target = $region12
      $region11: #{diverse_sampler.17} parent=5 // pred_region
        %s110 = ssub.s32 %s18, 1
      $region12: #{diverse_sampler.17} parent=5 // pred_fallthru
        _
      %p111 = scmp.lt.s32.totalorder %s18, 2
      // Predicated region
      $region13: #{diverse_sampler.17} parent=5 // pred_check
        %p112 = pneg %p111
      $region14: #{diverse_sampler.17} parent=5 // pred_check_branch
        %114 = sbr.rel (%p112) target = $region16
      $region15: #{diverse_sampler.17} parent=5 // pred_region
        // Predicated region
        $region17: #{diverse_sampler.17} parent=15 // pred_check
          %p115 = pneg %p38
        $region18: #{diverse_sampler.17} parent=15 // pred_check_branch
          %117 = sbr.rel (%p115) target = $region20
        $region19: #{diverse_sampler.17} parent=15 // pred_region
          %p118 = scmp.lt.s32.totalorder %s18, 1
          %s119 = scalar_select %p118, %s18, 1
          %s120 = smul.addr %s119, 2
          %s121 = smul.addr %s120, 8
          %s122 = scalar_lea.vmem %s1, %s121
        $region20: #{diverse_sampler.17} parent=15 // pred_fallthru
          _
        // Predicated region
        $region21: #{diverse_sampler.17} parent=15 // pred_check
          %p123 = pneg %p64
        $region22: #{diverse_sampler.17} parent=15 // pred_check_branch
          %125 = sbr.rel (%p123) target = $region24
        $region23: #{diverse_sampler.17} parent=15 // pred_region
          %p126 = scmp.lt.s32.totalorder %s18, 1
          %s127 = scalar_select %p126, %s18, 1
          %s128 = smul.addr %s127, 4
          %s129 = scalar_lea.vmem %s2, %s128
        $region24: #{diverse_sampler.17} parent=15 // pred_fallthru
          _
      $region16: #{diverse_sampler.17} parent=5 // pred_fallthru
        _
      %p130 = scmp.le.s32.totalorder 1, %s18
      %p131 = scmp.lt.s32.totalorder %s18, 3
      %p132 = pnand %p130, %p131
      %p133 = pneg %p132
      // Predicated region
      $region25: #{diverse_sampler.17} parent=5 // pred_check
        _
      $region26: #{diverse_sampler.17} parent=5 // pred_check_branch
        %135 = sbr.rel (%p132) target = $region28
      $region27: #{diverse_sampler.17} parent=5 // pred_region
        %s136 = ssub.s32 %s18, 1
        %p137 = scmp.lt.s32.totalorder %s23, 1
        %s138 = scalar_select %p137, %s23, 1
        %s139 = smul.addr %s138, 2
        %s140 = smul.addr %s139, 8
        %s141 = scalar_lea.vmem %s1, %s140
        %p142 = pneg %p44
        %p143 = pneg %p41
        %p144 = scmp.lt.s32.totalorder %s23, 1
        %s145 = scalar_select %p144, %s23, 1
        %s146 = smul.addr %s145, 4
        %s147 = scalar_lea.vmem %s2, %s146
        %p148 = pneg %p70
        %p149 = pneg %p67
        %p150 = pneg %p96
        %p151 = pneg %p93
        %s152 = sand.u32 %s83, 1
        %s153 = scalar_lea.sflag [#allocation6], %s152
        %s154 = sand.u32 %s83, 1
        %s155 = smul.addr %s154, 4
        %s156 = scalar_lea.vmem [#allocation5], %s155
        %p157 = scmp.lt.s32.totalorder %s23, 1
        %s158 = scalar_select %p157, %s23, 1
        %s159 = smul.addr %s158, 2
        %s160 = smul.addr %s159, 8
        %s161 = scalar_lea.vmem %s1, %s160
        %p162 = scmp.lt.s32.totalorder %s23, 1
        %s163 = scalar_select %p162, %s23, 1
        %s164 = smul.addr %s163, 4
        %s165 = scalar_lea.vmem %s2, %s164
        %v166 = vld [vmem:[%s161] sm:$0xff]
        %v167 = vld [vmem:[%s161 + $0x8] sm:$0xff]
        %vm168 = vcmask 261120
        %v170 = vsel %vm168, %v166, 0
        %v173 = vsel %vm168, %v167, 0
        %175 = vmatprep.subr.mxu0 0.0
        %176 = vmatpush1.xpose.msra.mxu0 0.0
        %177 = vmatprep.subr.mxu0 0.0
        %178 = vmatpush1.xpose.msra.mxu0 0.0
        %179 = vmatprep.subr.mxu0 0.0
        %180 = vmatpush1.xpose.msra.mxu0 0.0
        %181 = vmatprep.subr.mxu0 0.0
        %182 = vmatpush1.xpose.msra.mxu0 0.0
        %183 = vmatprep.subr.mxu0 0.0
        %184 = vmatpush1.xpose.msra.mxu0 0.0
        %185 = vmatprep.subr.mxu0 0.0
        %186 = vmatpush1.xpose.msra.mxu0 0.0
        %187 = vmatprep.subr.mxu0 0.0
        %188 = vmatpush1.xpose.msra.mxu0 0.0
        %189 = vmatprep.subr.mxu0 0.0
        %190 = vmatpush1.xpose.msra.mxu0 0.0
        %191 = vmatprep.subr.mxu0 0.0
        %192 = vmatpush1.xpose.msra.mxu0 0.0
        %193 = vmatprep.subr.mxu0 0.0
        %194 = vmatpush1.xpose.msra.mxu0 0.0
        %195 = vmatprep.subr.mxu0 0.0
        %196 = vmatpush1.xpose.msra.mxu0 0.0
        %197 = vmatprep.subr.mxu0 0.0
        %198 = vmatpush1.xpose.msra.mxu0 0.0
        %199 = vmatprep.subr.mxu0 0.0
        %200 = vmatpush1.xpose.msra.mxu0 0.0
        %201 = vmatprep.subr.mxu0 0.0
        %202 = vmatpush1.xpose.msra.mxu0 0.0
        %203 = vmatprep.subr.mxu0 0.0
        %204 = vmatpush1.xpose.msra.mxu0 %v173
        %205 = vmatprep.subr.mxu0 0.0
        %206 = vmatpush1.xpose.msra.mxu0 %v170
        %207 = vmatprep.subr.mxu0 0.0
        %208 = vmatpush2.xpose.msra.mxu0 0.0
        %209 = vmatprep.subr.mxu0 0.0
        %210 = vmatpush2.xpose.msra.mxu0 0.0
        %211 = vmatprep.subr.mxu0 0.0
        %212 = vmatpush2.xpose.msra.mxu0 0.0
        %213 = vmatprep.subr.mxu0 0.0
        %214 = vmatpush2.xpose.msra.mxu0 0.0
        %215 = vmatprep.subr.mxu0 0.0
        %216 = vmatpush2.xpose.msra.mxu0 0.0
        %217 = vmatprep.subr.mxu0 0.0
        %218 = vmatpush2.xpose.msra.mxu0 0.0
        %219 = vmatprep.subr.mxu0 0.0
        %220 = vmatpush2.xpose.msra.mxu0 0.0
        %221 = vmatprep.subr.mxu0 0.0
        %222 = vmatpush2.xpose.msra.mxu0 0.0
        %223 = vmatprep.subr.mxu0 0.0
        %224 = vmatpush2.xpose.msra.mxu0 0.0
        %225 = vmatprep.subr.mxu0 0.0
        %226 = vmatpush2.xpose.msra.mxu0 0.0
        %227 = vmatprep.subr.mxu0 0.0
        %228 = vmatpush2.xpose.msra.mxu0 0.0
        %229 = vmatprep.subr.mxu0 0.0
        %230 = vmatpush2.xpose.msra.mxu0 0.0
        %231 = vmatprep.subr.mxu0 0.0
        %232 = vmatpush2.xpose.msra.mxu0 0.0
        %233 = vmatprep.subr.mxu0 0.0
        %234 = vmatpush2.xpose.msra.mxu0 0.0
        %235 = vmatprep.subr.mxu0 0.0
        %236 = vmatpush2.xpose.msra.mxu0 0.0
        %237 = vmatprep.subr.mxu0 0.0
        %238 = vmatpush2.xpose.msra.mxu0 0.0
        %239 = vmatprep.mubr.f32.mxu0 0.0
        %240 = vmatmul.mubr.f32.gmra.mxu0 %v170
        %v241 = vpop.f32.mrf.mxu0
        %v242 = vadd.f32 0.0, %v241
        %v243 = vpop.f32.mrf.mxu0
        %244 = vmatprep.mubr.f32.mxu0 0.0
        %245 = vmatmul.mubr.f32.gmra.mxu0 %v173
        %v246 = vpop.f32.mrf.mxu0
        %v247 = vadd.f32 0.0, %v246
        %v248 = vpop.f32.mrf.mxu0
        %249 = vdwg.mxu0
        %vm250 = vcmask 130048
        %251 = vst.msk [vmem:[#allocation2] sm:$0xff] %vm250, %v242
        %252 = vst.msk [vmem:[#allocation2 + $0x8] sm:$0xff] %vm250, %v247
        %v253 = vmul.f32 %v166, %v166
        %v254 = vmul.f32 %v167, %v167
        %v256 = vsel %vm168, 1.0, 0
        %v259 = vsel %vm168, %v253, 0
        %v262 = vsel %vm168, %v254, 0
        %264 = vmatprep.subr.mxu0 0.0
        %265 = vmatpush1.xpose.msra.mxu0 0.0
        %266 = vmatprep.subr.mxu0 0.0
        %267 = vmatpush1.xpose.msra.mxu0 0.0
        %268 = vmatprep.subr.mxu0 0.0
        %269 = vmatpush1.xpose.msra.mxu0 0.0
        %270 = vmatprep.subr.mxu0 0.0
        %271 = vmatpush1.xpose.msra.mxu0 0.0
        %272 = vmatprep.subr.mxu0 0.0
        %273 = vmatpush1.xpose.msra.mxu0 0.0
        %274 = vmatprep.subr.mxu0 0.0
        %275 = vmatpush1.xpose.msra.mxu0 0.0
        %276 = vmatprep.subr.mxu0 0.0
        %277 = vmatpush1.xpose.msra.mxu0 0.0
        %278 = vmatprep.subr.mxu0 0.0
        %279 = vmatpush1.xpose.msra.mxu0 0.0
        %280 = vmatprep.subr.mxu0 0.0
        %281 = vmatpush1.xpose.msra.mxu0 0.0
        %282 = vmatprep.subr.mxu0 0.0
        %283 = vmatpush1.xpose.msra.mxu0 0.0
        %284 = vmatprep.subr.mxu0 0.0
        %285 = vmatpush1.xpose.msra.mxu0 0.0
        %286 = vmatprep.subr.mxu0 0.0
        %287 = vmatpush1.xpose.msra.mxu0 0.0
        %288 = vmatprep.subr.mxu0 0.0
        %289 = vmatpush1.xpose.msra.mxu0 0.0
        %290 = vmatprep.subr.mxu0 0.0
        %291 = vmatpush1.xpose.msra.mxu0 0.0
        %292 = vmatprep.subr.mxu0 0.0
        %293 = vmatpush1.xpose.msra.mxu0 %v262
        %294 = vmatprep.subr.mxu0 0.0
        %295 = vmatpush1.xpose.msra.mxu0 %v259
        %296 = vmatprep.subr.mxu0 0.0
        %297 = vmatpush2.xpose.msra.mxu0 0.0
        %298 = vmatprep.subr.mxu0 0.0
        %299 = vmatpush2.xpose.msra.mxu0 0.0
        %300 = vmatprep.subr.mxu0 0.0
        %301 = vmatpush2.xpose.msra.mxu0 0.0
        %302 = vmatprep.subr.mxu0 0.0
        %303 = vmatpush2.xpose.msra.mxu0 0.0
        %304 = vmatprep.subr.mxu0 0.0
        %305 = vmatpush2.xpose.msra.mxu0 0.0
        %306 = vmatprep.subr.mxu0 0.0
        %307 = vmatpush2.xpose.msra.mxu0 0.0
        %308 = vmatprep.subr.mxu0 0.0
        %309 = vmatpush2.xpose.msra.mxu0 0.0
        %310 = vmatprep.subr.mxu0 0.0
        %311 = vmatpush2.xpose.msra.mxu0 0.0
        %312 = vmatprep.subr.mxu0 0.0
        %313 = vmatpush2.xpose.msra.mxu0 0.0
        %314 = vmatprep.subr.mxu0 0.0
        %315 = vmatpush2.xpose.msra.mxu0 0.0
        %316 = vmatprep.subr.mxu0 0.0
        %317 = vmatpush2.xpose.msra.mxu0 0.0
        %318 = vmatprep.subr.mxu0 0.0
        %319 = vmatpush2.xpose.msra.mxu0 0.0
        %320 = vmatprep.subr.mxu0 0.0
        %321 = vmatpush2.xpose.msra.mxu0 0.0
        %322 = vmatprep.subr.mxu0 0.0
        %323 = vmatpush2.xpose.msra.mxu0 0.0
        %324 = vmatprep.subr.mxu0 0.0
        %325 = vmatpush2.xpose.msra.mxu0 0.0
        %326 = vmatprep.subr.mxu0 0.0
        %327 = vmatpush2.xpose.msra.mxu0 0.0
        %328 = vmatprep.mubr.f32.mxu0 0.0
        %329 = vmatmul.mubr.f32.gmra.mxu0 %v256
        %v330 = vpop.f32.mrf.mxu0
        %v331 = vadd.f32 0.0, %v330
        %v332 = vpop.f32.mrf.mxu0
        %333 = vdwg.mxu0
        %v334 = vlaneseq
        %v335 = vand.u32 %v334, 127
        %s336 = sld [smem:[#allocation4 + %s23]]
        %s337 = scalar_lea.vmem %s161, %s336
        %v338 = vld [vmem:[%s337] sm:$0x1]
        %v339 = vmul.f32 %v338, %v338
        %vm340 = vcmask 253952
        %v341 = vsel %vm340, %v339, 0.0
        %342 = vadd.xlane.f32.xlu0 %v341
        %v343 = vpop.xlane.xlu0 %342
        %v344 = vrot.slane %v343, 4
        %v345 = vadd.f32 %v343, %v344
        %v346 = vrot.slane %v345, 2
        %v347 = vadd.f32 %v345, %v346
        %v348 = vrot.slane %v347, 1
        %v349 = vadd.f32 %v347, %v348
        %s350 = vtos %v349
        %s351 = scalar_lea.vmem [#allocation2], %s336
        %v352 = vld [vmem:[%s351] sm:$0x1]
        %v353 = vstv %s350
        %v354 = vadd.f32 %v331, %v353
        %v355 = vmul.f32 %v352, 2.0
        %v356 = vsub.f32 %v354, %v355
        %v357 = vmax.f32 %v356, 0.0
        %v358 = vstv %s336
        %vm359 = vcmp.eq.s32.totalorder %v335, %v358
        %v360 = vsel %vm359, 0.0, %v357
        %361 = vst.msk [vmem:[%s156] sm:$0x1] %vm340, %v338
        %v362 = vld [vmem:[%s165] sm:$0x1]
        %vm363 = vcmp.gt.f32.partialorder %v360, 0.0
        %v364 = vrsqrt.pop %v360
        %v365 = vmul.f32 %v362, %v364
        %v366 = vsel %vm363, %v365, inf
        %vm367 = vcmask 122880
        %v368 = vsel %vm367, %v366, inf
        %369 = vmin.xlane.f32.xlu0 %v368
        %v370 = vpop.xlane.xlu0 %369
        %v371 = vrot.slane %v370, 4
        %v372 = vmin.f32 %v370, %v371
        %v373 = vrot.slane %v372, 2
        %v374 = vmin.f32 %v372, %v373
        %v375 = vrot.slane %v374, 1
        %v376 = vmin.f32 %v374, %v375
        %s377 = vtos %v376
        %v378 = vstv %s377
        %vm379 = vcmp.eq.f32.partialorder %v366, %v378
        %v380 = vsel %vm379, %v335, 16
        %v381 = vsel %vm367, %v380, 2147483647
        %v382 = vand.u32 %v381, 65535
        %v383 = vshra.s32 %v381, 16
        %v384 = vcvt.s32.f32 %v382
        %v385 = vcvt.s32.f32 %v383
        %386 = vmin.xlane.f32.xlu0 %v385
        %v387 = vpop.xlane.xlu0 %386
        %vm388 = vcmp.eq.f32.partialorder %v385, %v387
        %v389 = vsel %vm388, %v384, inf
        %390 = vmin.xlane.f32.xlu0 %v389
        %v391 = vpop.xlane.xlu0 %390
        %v392 = vcvt.f32.s32 %v391
        %v393 = vcvt.f32.s32 %v387
        %v394 = vshll.u32 %v393, 16
        %v395 = vadd.s32 %v394, %v392
        %v396 = vrot.slane %v395, 4
        %vm397 = vcmp.lt.s32.totalorder %v395, %v396
        %v398 = vsel %vm397, %v395, %v396
        %v399 = vrot.slane %v398, 2
        %vm400 = vcmp.lt.s32.totalorder %v398, %v399
        %v401 = vsel %vm400, %v398, %v399
        %v402 = vrot.slane %v401, 1
        %vm403 = vcmp.lt.s32.totalorder %v401, %v402
        %v404 = vsel %vm403, %v401, %v402
        %s405 = vtos %v404
        %s406 = scalar_lea.vmem %s161, %s405
        %v407 = vld [vmem:[%s406] sm:$0x1]
        %v408 = vmul.f32 %v407, %v407
        %v409 = vsel %vm340, %v408, 0.0
        %410 = vadd.xlane.f32.xlu0 %v409
        %v411 = vpop.xlane.xlu0 %410
        %v412 = vrot.slane %v411, 4
        %v413 = vadd.f32 %v411, %v412
        %v414 = vrot.slane %v413, 2
        %v415 = vadd.f32 %v413, %v414
        %v416 = vrot.slane %v415, 1
        %v417 = vadd.f32 %v415, %v416
        %s418 = vtos %v417
        %s419 = scalar_lea.vmem [#allocation2], %s405
        %v420 = vld [vmem:[%s419] sm:$0x1]
        %v421 = vstv %s418
        %v422 = vadd.f32 %v331, %v421
        %v423 = vmul.f32 %v420, 2.0
        %v424 = vsub.f32 %v422, %v423
        %v425 = vmax.f32 %v424, 0.0
        %v426 = vstv %s405
        %vm427 = vcmp.eq.s32.totalorder %v335, %v426
        %v428 = vsel %vm427, 0.0, %v425
        %429 = vst.msk [vmem:[%s156 + $0x1] sm:$0x1] %vm340, %v407
        %v430 = vmin.f32 %v360, %v428
        %v431 = vld [vmem:[%s165 + $0x1] sm:$0x1]
        %vm432 = vcmp.gt.f32.partialorder %v430, 0.0
        %v433 = vrsqrt.pop %v430
        %v434 = vmul.f32 %v431, %v433
        %v435 = vsel %vm432, %v434, inf
        %v436 = vsel %vm367, %v435, inf
        %437 = vmin.xlane.f32.xlu0 %v436
        %v438 = vpop.xlane.xlu0 %437
        %v439 = vrot.slane %v438, 4
        %v440 = vmin.f32 %v438, %v439
        %v441 = vrot.slane %v440, 2
        %v442 = vmin.f32 %v440, %v441
        %v443 = vrot.slane %v442, 1
        %v444 = vmin.f32 %v442, %v443
        %s445 = vtos %v444
        %v446 = vstv %s445
        %vm447 = vcmp.eq.f32.partialorder %v435, %v446
        %v448 = vsel %vm447, %v335, 16
        %v449 = vsel %vm367, %v448, 2147483647
        %v450 = vand.u32 %v449, 65535
        %v451 = vshra.s32 %v449, 16
        %v452 = vcvt.s32.f32 %v450
        %v453 = vcvt.s32.f32 %v451
        %454 = vmin.xlane.f32.xlu0 %v453
        %v455 = vpop.xlane.xlu0 %454
        %vm456 = vcmp.eq.f32.partialorder %v453, %v455
        %v457 = vsel %vm456, %v452, inf
        %458 = vmin.xlane.f32.xlu0 %v457
        %v459 = vpop.xlane.xlu0 %458
        %v460 = vcvt.f32.s32 %v459
        %v461 = vcvt.f32.s32 %v455
        %v462 = vshll.u32 %v461, 16
        %v463 = vadd.s32 %v462, %v460
        %v464 = vrot.slane %v463, 4
        %vm465 = vcmp.lt.s32.totalorder %v463, %v464
        %v466 = vsel %vm465, %v463, %v464
        %v467 = vrot.slane %v466, 2
        %vm468 = vcmp.lt.s32.totalorder %v466, %v467
        %v469 = vsel %vm468, %v466, %v467
        %v470 = vrot.slane %v469, 1
        %vm471 = vcmp.lt.s32.totalorder %v469, %v470
        %v472 = vsel %vm471, %v469, %v470
        %s473 = vtos %v472
        %s474 = scalar_lea.vmem %s161, %s473
        %v475 = vld [vmem:[%s474] sm:$0x1]
        %v476 = vmul.f32 %v475, %v475
        %v477 = vsel %vm340, %v476, 0.0
        %478 = vadd.xlane.f32.xlu0 %v477
        %v479 = vpop.xlane.xlu0 %478
        %v480 = vrot.slane %v479, 4
        %v481 = vadd.f32 %v479, %v480
        %v482 = vrot.slane %v481, 2
        %v483 = vadd.f32 %v481, %v482
        %v484 = vrot.slane %v483, 1
        %v485 = vadd.f32 %v483, %v484
        %s486 = vtos %v485
        %s487 = scalar_lea.vmem [#allocation2], %s473
        %v488 = vld [vmem:[%s487] sm:$0x1]
        %v489 = vstv %s486
        %v490 = vadd.f32 %v331, %v489
        %v491 = vmul.f32 %v488, 2.0
        %v492 = vsub.f32 %v490, %v491
        %v493 = vmax.f32 %v492, 0.0
        %v494 = vstv %s473
        %vm495 = vcmp.eq.s32.totalorder %v335, %v494
        %v496 = vsel %vm495, 0.0, %v493
        %497 = vst.msk [vmem:[%s156 + $0x2] sm:$0x1] %vm340, %v475
        %v498 = vmin.f32 %v430, %v496
        %v499 = vld [vmem:[%s165 + $0x2] sm:$0x1]
        %vm500 = vcmp.gt.f32.partialorder %v498, 0.0
        %v501 = vrsqrt.pop %v498
        %v502 = vmul.f32 %v499, %v501
        %v503 = vsel %vm500, %v502, inf
        %v504 = vsel %vm367, %v503, inf
        %505 = vmin.xlane.f32.xlu0 %v504
        %v506 = vpop.xlane.xlu0 %505
        %v507 = vrot.slane %v506, 4
        %v508 = vmin.f32 %v506, %v507
        %v509 = vrot.slane %v508, 2
        %v510 = vmin.f32 %v508, %v509
        %v511 = vrot.slane %v510, 1
        %v512 = vmin.f32 %v510, %v511
        %s513 = vtos %v512
        %v514 = vstv %s513
        %vm515 = vcmp.eq.f32.partialorder %v503, %v514
        %v516 = vsel %vm515, %v335, 16
        %v517 = vsel %vm367, %v516, 2147483647
        %v518 = vand.u32 %v517, 65535
        %v519 = vshra.s32 %v517, 16
        %v520 = vcvt.s32.f32 %v518
        %v521 = vcvt.s32.f32 %v519
        %522 = vmin.xlane.f32.xlu0 %v521
        %v523 = vpop.xlane.xlu0 %522
        %vm524 = vcmp.eq.f32.partialorder %v521, %v523
        %v525 = vsel %vm524, %v520, inf
        %526 = vmin.xlane.f32.xlu0 %v525
        %v527 = vpop.xlane.xlu0 %526
        %v528 = vcvt.f32.s32 %v527
        %v529 = vcvt.f32.s32 %v523
        %v530 = vshll.u32 %v529, 16
        %v531 = vadd.s32 %v530, %v528
        %v532 = vrot.slane %v531, 4
        %vm533 = vcmp.lt.s32.totalorder %v531, %v532
        %v534 = vsel %vm533, %v531, %v532
        %v535 = vrot.slane %v534, 2
        %vm536 = vcmp.lt.s32.totalorder %v534, %v535
        %v537 = vsel %vm536, %v534, %v535
        %v538 = vrot.slane %v537, 1
        %vm539 = vcmp.lt.s32.totalorder %v537, %v538
        %v540 = vsel %vm539, %v537, %v538
        %s541 = vtos %v540
        %s542 = scalar_lea.vmem %s161, %s541
        %v543 = vld [vmem:[%s542] sm:$0x1]
        %544 = vst.msk [vmem:[%s156 + $0x3] sm:$0x1] %vm340, %v543
        %s545 = sand.u32 %s83, 1
        %s546 = scalar_lea.sflag [#allocation6], %s545
        %s547 = sand.u32 %s83, 1
        %s548 = smul.addr %s547, 4
        %s549 = scalar_lea.vmem [#allocation5], %s548
        // Predicated region
        $region29: #{diverse_sampler.17} parent=27 // pred_check
          %p550 = pneg %p93
        $region30: #{diverse_sampler.17} parent=27 // pred_check_branch
          %552 = sbr.rel (%p550) target = $region32
        $region31: #{diverse_sampler.17} parent=27 // pred_region
          %s554 = ssub.s32 64, 64
          %555 = vsyncadd %s546, %s554
          %s556 = smul.addr %s23, 64
          %s557 = scalar_lea.hbm %s3, %s556
          %s559 = sshll.u32 %s549, 4
          %s560 = int_to_ptr.vmem [resolvable:$true] %s559
          %562 = dma.vmem_to_hbm [thread:$0]  %s560, 64, %s557, %s546
        $region32: #{diverse_sampler.17} parent=27 // pred_fallthru
          _
      $region28: #{diverse_sampler.17} parent=5 // pred_fallthru
        _
      %p563 = scmp.le.s32.totalorder 2, %s18
      // Predicated region
      $region33: #{diverse_sampler.17} parent=5 // pred_check
        %p564 = pneg %p563
      $region34: #{diverse_sampler.17} parent=5 // pred_check_branch
        %566 = sbr.rel (%p564) target = $region36
      $region35: #{diverse_sampler.17} parent=5 // pred_region
        %s567 = ssub.s32 %s18, 2
        // Predicated region
        $region37: #{diverse_sampler.17} parent=35 // pred_check
          %p568 = pneg %p99
        $region38: #{diverse_sampler.17} parent=35 // pred_check_branch
          %570 = sbr.rel (%p568) target = $region40
        $region39: #{diverse_sampler.17} parent=35 // pred_region
          %s571 = sand.u32 %s84, 1
          %s572 = scalar_lea.sflag [#allocation6], %s571
          %s573 = sand.u32 %s84, 1
          %s574 = smul.addr %s573, 4
          %s575 = scalar_lea.vmem [#allocation5], %s574
          %576 = dma.done %s572, 64
        $region40: #{diverse_sampler.17} parent=35 // pred_fallthru
          _
      $region36: #{diverse_sampler.17} parent=5 // pred_fallthru
        _
    $region6: #{diverse_sampler.17} parent=1 // loop_footer
      %s22 = sadd.s32 1, %s18
    $region7: #{diverse_sampler.17} parent=1 // loop_footer_branch
      %17 = sbr.rel target = $region3
    $region8: #{diverse_sampler.17} parent=1 // loop_exit
      _
    %577 = vsyncpa [#allocation6], 1
    %s578 = scalar_lea.sflag [#allocation6], 1
    %579 = vsyncpa %s578, 1

</llo_original>
